<compile_context>
chip_gen: v5e
topology: v5e:2x2
jax: 0.10.0
libtpu: 0.0.40
codegen_flags: <defaults>
</compile_context>

<pallas_src>
import jax
import jax.numpy as jnp
import numpy as np
from jax.experimental import pallas as pl
from jax.experimental.pallas import tpu as pltpu

EPS = 1e-5        # PyTorch BatchNorm default eps
BT = 128          # batch tile (sublane rows). 128 fills v5e's MXU; 256 ok on v6e/v7x.

# contract dim 1 of lhs with dim 1 of rhs (i.e. lhs @ rhs.T) -> lane-dense output
_NT_DIMS = (((1,), (1,)), ((), ()))


def value_head_kernel(x_ref, win_ref, wout_ref, b2_ref, o_ref):
    """One batch tile of BT boards.

    x_ref    : (BT, C*16)  f32   flattened boards (batch on sublanes)
    win_ref  : (C*16+8,16) f32   rows [0,C*16): folded Conv2d(C,1,1)+BN weight,
                                 row C*16: folded bias, rest zero padding
    wout_ref : (32, 256)   f32   rows 0:16 Linear(16,256).weight.T, row 16 its bias,
                                 row 24 Linear(256,1).weight row, rest zero padding
    b2_ref   : (1, 1)      f32   Linear(256,1) bias (SMEM scalar)
    o_ref    : (1, BT)     f32   sigmoid outputs, batch along the lane axis
    """
    cd = win_ref.shape[0] - 8                                   # C*16 (static)

    # Stage 1: Conv2d(C,1,1) + eval-mode BatchNorm1d(4), folded into one matmul.
    x = x_ref[...].astype(jnp.bfloat16)                         # (BT, C*16)
    w_in = win_ref[0:cd, :].astype(jnp.bfloat16)                # (C*16, 16)
    b_in = win_ref[cd:cd + 1, :]                                # (1, 16) f32
    h0 = jnp.dot(x, w_in, preferred_element_type=jnp.float32) + b_in
    h0 = jnp.maximum(h0, 0.0)                                   # ReLU, (BT, 16) f32

    # Stage 2: Linear(16, 256) + ReLU.
    w1 = wout_ref[0:16, :].astype(jnp.bfloat16)                 # (16, 256)
    b1 = wout_ref[16:17, :]                                     # (1, 256) f32
    h1 = jnp.dot(h0.astype(jnp.bfloat16), w1,
                 preferred_element_type=jnp.float32) + b1
    h1 = jnp.maximum(h1, 0.0)                                   # (BT, 256) f32

    # Stage 3: Linear(256, 1) as (1,256) x (BT,256)^T so the result (and the
    # output block) is lane-dense: (1, BT).
    w2 = wout_ref[24:25, :].astype(jnp.bfloat16)                # (1, 256)
    logit = jax.lax.dot_general(w2, h1.astype(jnp.bfloat16),
                                dimension_numbers=_NT_DIMS,
                                preferred_element_type=jnp.float32)  # (1, BT)
    logit = logit + b2_ref[0, 0]
    o_ref[...] = jax.nn.sigmoid(logit)                          # Sigmoid (stable form)


def init_params(channel, key):
    """Raw parameters matching the PyTorch module's shapes/init (eval-mode BN)."""
    ks = jax.random.split(key, 6)
    bc = 1.0 / np.sqrt(channel)
    w_conv = jax.random.uniform(ks[0], (channel,), jnp.float32, -bc, bc)  # Conv2d weight
    b_conv = jax.random.uniform(ks[1], (), jnp.float32, -bc, bc)          # Conv2d bias
    bn_gamma = jnp.ones((4,), jnp.float32)                                # BN defaults
    bn_beta = jnp.zeros((4,), jnp.float32)
    bn_mean = jnp.zeros((4,), jnp.float32)
    bn_var = jnp.ones((4,), jnp.float32)
    b1b = 1.0 / np.sqrt(16.0)
    w1t = jax.random.uniform(ks[2], (16, 256), jnp.float32, -b1b, b1b)    # Linear(16,256).weight.T
    b1 = jax.random.uniform(ks[3], (256,), jnp.float32, -b1b, b1b)
    b2b = 1.0 / np.sqrt(256.0)
    w2row = jax.random.uniform(ks[4], (256,), jnp.float32, -b2b, b2b)     # Linear(256,1).weight[0]
    b2 = jax.random.uniform(ks[5], (), jnp.float32, -b2b, b2b)
    return dict(w_conv=w_conv, b_conv=b_conv, bn_gamma=bn_gamma, bn_beta=bn_beta,
                bn_mean=bn_mean, bn_var=bn_var, w1t=w1t, b1=b1, w2row=w2row, b2=b2)


def pack_params(p):
    """Fold eval-mode BN (+conv bias) into the conv and pack operands into 2 slabs."""
    C = p["w_conv"].shape[0]
    cd = C * 16
    # Per flattened position q = 4*row + col; BN channel is the row (H axis).
    scale = p["bn_gamma"] * jax.lax.rsqrt(p["bn_var"] + EPS)              # (4,)
    scale16 = jnp.repeat(scale, 4)                                        # (16,)
    bias16 = jnp.repeat((p["b_conv"] - p["bn_mean"]) * scale + p["bn_beta"], 4)  # (16,)
    # Folded conv+BN as a (C*16, 16) channel-mixing matrix:
    #   W_in[c*16 + q, q] = w_conv[c] * scale16[q]
    eye = jnp.eye(16, dtype=jnp.float32) * scale16[None, :]               # (16, 16)
    w_in = (p["w_conv"][:, None, None] * eye[None, :, :]).reshape(cd, 16)
    win_slab = jnp.concatenate(
        [w_in, bias16[None, :], jnp.zeros((7, 16), jnp.float32)], axis=0)  # (cd+8, 16)

    wout_slab = jnp.zeros((32, 256), jnp.float32)
    wout_slab = wout_slab.at[0:16, :].set(p["w1t"])     # Linear(16,256) weight (transposed)
    wout_slab = wout_slab.at[16, :].set(p["b1"])        # its bias
    wout_slab = wout_slab.at[24, :].set(p["w2row"])     # Linear(256,1) weight row (lane-dense)
    return dict(win_slab=win_slab, wout_slab=wout_slab, b2=p["b2"].reshape(1, 1))


def value_head_forward_batched(xb, packed):
    """xb: (B, C, 4, 4) f32 -> (B,) f32 (the module applied independently per board)."""
    B, C = xb.shape[0], xb.shape[1]
    cd = C * 16
    x2 = xb.reshape(B, cd).astype(jnp.float32)
    Bp = ((B + BT - 1) // BT) * BT
    if Bp != B:                                       # pad batch to a whole tile
        x2 = jnp.pad(x2, ((0, Bp - B), (0, 0)))
    G = Bp // BT

    out = pl.pallas_call(
        value_head_kernel,
        out_shape=jax.ShapeDtypeStruct((1, Bp), jnp.float32),
        grid=(G,),
        in_specs=[
            pl.BlockSpec((BT, cd), lambda i: (i, 0)),              # boards (gridded)
            pl.BlockSpec((cd + 8, 16), lambda i: (0, 0)),          # folded conv+BN slab (resident)
            pl.BlockSpec((32, 256), lambda i: (0, 0)),             # linear weights/biases slab (resident)
            pl.BlockSpec((1, 1), lambda i: (0, 0),
                         memory_space=pltpu.MemorySpace.SMEM),     # scalar b2
        ],
        out_specs=pl.BlockSpec((1, BT), lambda i: (0, i)),         # lane-dense output row
        compiler_params=pltpu.CompilerParams(
            dimension_semantics=("parallel",)),                    # megacore on v7x
    )(x2, packed["win_slab"], packed["wout_slab"], packed["b2"])
    return out.reshape(Bp)[:B]


def value_head_forward(x, packed):
    """Original module signature: x (C, 4, 4) -> (1,)."""
    return value_head_forward_batched(x[None, ...], packed)


def value_head_ref(x, p):
    """Pure-JAX f32 reference of the PyTorch module (eval-mode BatchNorm)."""
    conv = jnp.einsum('c,chw->hw', p["w_conv"], x) + p["b_conv"]          # (4, 4)
    inv = jax.lax.rsqrt(p["bn_var"] + EPS)
    bn = ((conv - p["bn_mean"][:, None]) * inv[:, None] * p["bn_gamma"][:, None]
          + p["bn_beta"][:, None])
    h = jnp.maximum(bn, 0.0).reshape(16)
    h1 = jnp.maximum(h @ p["w1t"] + p["b1"], 0.0)                         # (256,)
    logit = h1 @ p["w2row"] + p["b2"]
    return jax.nn.sigmoid(logit).reshape(1)


if __name__ == "__main__":
    channel = 8
    B = 192                                   # not a multiple of BT -> exercises padding
    key = jax.random.PRNGKey(0)
    kx, kp = jax.random.split(key)
    xb = jax.random.normal(kx, (B, channel, 4, 4), dtype=jnp.float32)
    raw = init_params(channel, kp)
    packed = pack_params(raw)

    out = jax.block_until_ready(value_head_forward_batched(xb, packed))
    ref = jax.block_until_ready(
        jax.vmap(value_head_ref, in_axes=(0, None))(xb, raw).reshape(B))
    assert out.shape == (B,)
    # bf16 MXU inputs (f32 accumulation) vs the f32 reference -> loose tolerance.
    np.testing.assert_allclose(np.asarray(out), np.asarray(ref), rtol=2e-2, atol=2e-2)

    # Single-board path, matching the original module's (C,4,4) -> (1,) signature.
    out1 = jax.block_until_ready(value_head_forward(xb[0], packed))
    assert out1.shape == (1,)
    np.testing.assert_allclose(np.asarray(out1), np.asarray(ref[:1]), rtol=2e-2, atol=2e-2)

    print("KERNEL_OK")
</pallas_src>

<mosaic_0001>
module attributes {stable_mosaic.version = 11 : i64} {
  func.func @value_head_kernel(%arg0: i32, %arg1: memref<128x128xf32, #tpu.memory_space<vmem>>, %arg2: memref<136x16xf32, #tpu.memory_space<vmem>>, %arg3: memref<32x256xf32, #tpu.memory_space<vmem>>, %arg4: memref<1x1xf32, #tpu.memory_space<smem>>, %arg5: memref<1x128xf32, #tpu.memory_space<vmem>>) attributes {dimension_semantics = [#tpu.dimension_semantics<parallel>], iteration_bounds = array<i64: 2>, scalar_prefetch = 0 : i64, scratch_operands = 0 : i64, tpu.core_type = #tpu.core_type<tc>, window_params = [{transform_indices = @transform_0, window_bounds = array<i64: 128, 128>}, {pipeline_mode = #tpu.pipeline_mode<synchronous>, transform_indices = @transform_1, window_bounds = array<i64: 136, 16>}, {pipeline_mode = #tpu.pipeline_mode<synchronous>, transform_indices = @transform_2, window_bounds = array<i64: 32, 256>}, {transform_indices = @transform_3, window_bounds = array<i64: 1, 1>}, {transform_indices = @transform_4, window_bounds = array<i64: 1, 128>}]} {
    %c0 = arith.constant 0 : index
    %c0_0 = arith.constant 0 : index
    %0 = vector.load %arg1[%c0, %c0_0] : memref<128x128xf32, #tpu.memory_space<vmem>>, vector<128x128xf32>
    %1 = arith.truncf %0 : vector<128x128xf32> to vector<128x128xbf16>
    %c0_1 = arith.constant 0 : index
    %c0_2 = arith.constant 0 : index
    %2 = vector.load %arg2[%c0_1, %c0_2] : memref<136x16xf32, #tpu.memory_space<vmem>>, vector<128x16xf32>
    %3 = arith.truncf %2 : vector<128x16xf32> to vector<128x16xbf16>
    %c128 = arith.constant 128 : index
    %c0_3 = arith.constant 0 : index
    %4 = vector.load %arg2[%c128, %c0_3] : memref<136x16xf32, #tpu.memory_space<vmem>>, vector<1x16xf32>
    %cst = arith.constant dense<0.000000e+00> : vector<128x16xf32>
    %5 = tpu.matmul %1, %3, %cst {dimension_numbers = #tpu.dot_dimension_numbers<[1], [0], [0], [1], [0, 0, 1, 1], [], []>} : vector<128x128xbf16>, vector<128x16xbf16>, vector<128x16xf32> -> vector<128x16xf32>
    %6 = vector.broadcast %4 : vector<1x16xf32> to vector<128x16xf32>
    %7 = arith.addf %5, %6 : vector<128x16xf32>
    %cst_4 = arith.constant 0.000000e+00 : f32
    %8 = vector.broadcast %cst_4 : f32 to vector<128x16xf32>
    %9 = arith.maximumf %7, %8 : vector<128x16xf32>
    %c0_5 = arith.constant 0 : index
    %c0_6 = arith.constant 0 : index
    %10 = vector.load %arg3[%c0_5, %c0_6] : memref<32x256xf32, #tpu.memory_space<vmem>>, vector<16x256xf32>
    %11 = arith.truncf %10 : vector<16x256xf32> to vector<16x256xbf16>
    %c16 = arith.constant 16 : index
    %c0_7 = arith.constant 0 : index
    %12 = vector.load %arg3[%c16, %c0_7] : memref<32x256xf32, #tpu.memory_space<vmem>>, vector<1x256xf32>
    %13 = arith.truncf %9 : vector<128x16xf32> to vector<128x16xbf16>
    %cst_8 = arith.constant dense<0.000000e+00> : vector<128x256xf32>
    %14 = tpu.matmul %13, %11, %cst_8 {dimension_numbers = #tpu.dot_dimension_numbers<[1], [0], [0], [1], [0, 0, 1, 1], [], []>} : vector<128x16xbf16>, vector<16x256xbf16>, vector<128x256xf32> -> vector<128x256xf32>
    %15 = vector.broadcast %12 : vector<1x256xf32> to vector<128x256xf32>
    %16 = arith.addf %14, %15 : vector<128x256xf32>
    %cst_9 = arith.constant 0.000000e+00 : f32
    %17 = vector.broadcast %cst_9 : f32 to vector<128x256xf32>
    %18 = arith.maximumf %16, %17 : vector<128x256xf32>
    %c24 = arith.constant 24 : index
    %c0_10 = arith.constant 0 : index
    %19 = vector.load %arg3[%c24, %c0_10] : memref<32x256xf32, #tpu.memory_space<vmem>>, vector<1x256xf32>
    %20 = arith.truncf %19 : vector<1x256xf32> to vector<1x256xbf16>
    %21 = arith.truncf %18 : vector<128x256xf32> to vector<128x256xbf16>
    %cst_11 = arith.constant dense<0.000000e+00> : vector<1x128xf32>
    %22 = tpu.matmul %20, %21, %cst_11 {dimension_numbers = #tpu.dot_dimension_numbers<[1], [1], [0], [0], [0, 0, 1, 0], [], []>} : vector<1x256xbf16>, vector<128x256xbf16>, vector<1x128xf32> -> vector<1x128xf32>
    %c0_12 = arith.constant 0 : index
    %c0_13 = arith.constant 0 : index
    %23 = memref.load %arg4[%c0_12, %c0_13] : memref<1x1xf32, #tpu.memory_space<smem>>
    %24 = vector.broadcast %23 : f32 to vector<1x128xf32>
    %25 = arith.addf %22, %24 : vector<1x128xf32>
    %26 = arith.negf %25 : vector<1x128xf32>
    %27 = math.exp %26 : vector<1x128xf32>
    %cst_14 = arith.constant 1.000000e+00 : f32
    %28 = vector.broadcast %cst_14 : f32 to vector<1x128xf32>
    %29 = arith.addf %28, %27 : vector<1x128xf32>
    %30 = arith.divf %28, %29 : vector<1x128xf32>
    %c0_15 = arith.constant 0 : index
    %c0_16 = arith.constant 0 : index
    %31 = vector.load %arg5[%c0_15, %c0_16] : memref<1x128xf32, #tpu.memory_space<vmem>>, vector<1x128xf32>
    tpu.vector_store %arg5[%c0_15, %c0_16], %30 {strides = array<i32>} : memref<1x128xf32, #tpu.memory_space<vmem>>, vector<1x128xf32>,
    return
  }
  func.func @transform_0(%arg0: i32) -> (i32, i32) {
    %c0_i32 = arith.constant 0 : i32
    %c0_i32_0 = arith.constant 0 : i32
    return %arg0, %c0_i32 : i32, i32
  }
  func.func @transform_1(%arg0: i32) -> (i32, i32) {
    %c0_i32 = arith.constant 0 : i32
    %c0_i32_0 = arith.constant 0 : i32
    %c0_i32_1 = arith.constant 0 : i32
    return %c0_i32, %c0_i32_0 : i32, i32
  }
  func.func @transform_2(%arg0: i32) -> (i32, i32) {
    %c0_i32 = arith.constant 0 : i32
    %c0_i32_0 = arith.constant 0 : i32
    %c0_i32_1 = arith.constant 0 : i32
    return %c0_i32, %c0_i32_0 : i32, i32
  }
  func.func @transform_3(%arg0: i32) -> (i32, i32) {
    %c0_i32 = arith.constant 0 : i32
    %c0_i32_0 = arith.constant 0 : i32
    %c0_i32_1 = arith.constant 0 : i32
    return %c0_i32, %c0_i32_0 : i32, i32
  }
  func.func @transform_4(%arg0: i32) -> (i32, i32) {
    %c0_i32 = arith.constant 0 : i32
    %c0_i32_0 = arith.constant 0 : i32
    return %c0_i32, %arg0 : i32, i32
  }
}

</mosaic_0001>

<llo_original>
// kernel: tpu_custom_call.1
$region0: #{tpu_custom_call.1}
  #allocation0 [shape = 'u32[]', space=smem, size = 0x4, offset = 0x4, fixed_abs, tag = 'smem constant byte address 0x4 - core index']
  #allocation1 [shape = 'u32[72,128]{1,0:T(1,128)}', space=vmem, size = 0x9000, scoped, tag = 'internal scratch']
  #allocation2 [shape = 'f32[1,1]{1,0:T(1,128)S(6)}', space=smem, size = 0x200, scoped, tag = 'scoped memory for tpu_custom_call.1']
  %s0 = inlined_call_operand.hbm [shape: f32[256,128], index: 0, kind: input, shape index: {}]
  %s1 = inlined_call_operand.vmem [shape: f32[136,16], index: 1, kind: input, shape index: {}]
  %s2 = inlined_call_operand.vmem [shape: f32[32,256], index: 2, kind: input, shape index: {}]
  %s3 = inlined_call_operand.<no memory space> [shape: f32[1,1], index: 3, kind: input, shape index: {}]
  %s4 = inlined_call_operand.hbm [shape: f32[1,256], index: 4, kind: output, shape index: {}]
  %s5 = sld [smem:[#allocation0]]
  $region53: #{tpu_custom_call.1} parent=0
    _
  %s7 = ssub.s32 1, %s5
  %s8 = scalar_select 0, %s7, %s5
  %9 = sst [smem:[#allocation2]] %s3
  $region1: #{tpu_custom_call.1} parent=0
    #allocation3 [shape = 'u8[131072]{0}', space=vmem, size = 0x20000, scoped, tag = 'input window, operand 0']
    #allocation4 [shape = 's32[2]{0}', space=sflag, size = 0x8, scoped, tag = 'scoped memory for tpu_custom_call.1']
    #allocation5 [shape = 's32[2]{0}', space=sflag, size = 0x8, scoped, tag = 'scoped memory for tpu_custom_call.1']
    #allocation6 [shape = 'u8[1024]{0}', space=vmem, size = 0x400, scoped, tag = 'output window, operand 0']
    %10 = vsyncpa [#allocation4], 0
    %s11 = scalar_lea.sflag [#allocation4], 1
    %12 = vsyncpa %s11, 0
    %13 = vsyncpa [#allocation5], 0
    %s14 = scalar_lea.sflag [#allocation5], 1
    %15 = vsyncpa %s14, 0
    loop: start=0, step=1, limit=4
    $region2: #{tpu_custom_call.1} parent=1 // loop_pre_header
      _
    $region3: #{tpu_custom_call.1} parent=1 // loop_header
      %s17 = sphi 0, %s21
      %p18 = scmp.ge.s32.totalorder %s17, 4
      %s27 = sphi 0, %s29
      %s30 = sphi 0, %s27
      %s31 = sphi 0, %s30
      %s47 = sphi 0, %s31
      %s51 = sphi 0, %s51
      %s53 = sphi 0, %s51
      %s54 = sphi 0, %s53
      %s68 = sphi 0, %s54
      %s72 = sphi 0, %s72
      %s74 = sphi 0, %s72
      %s75 = sphi 0, %s74
      %s89 = sphi 0, %s75
      %s93 = sphi 0, %s93
      %s95 = sphi 0, %s93
      %s96 = sphi 0, %s95
      %s110 = sphi 0, %s96
      %s116 = sphi 0, %s118
      %s119 = sphi 0, %s116
      %s120 = sphi 0, %s119
      %s136 = sphi 0, %s120
    $region4: #{tpu_custom_call.1} parent=1 // loop_header_branch
      %20 = sbr.rel (%p18) target = $region8
    $region5: #{tpu_custom_call.1} parent=1 // loop_body
      %s22 = ssub.s32 %s17, 1
      %s23 = ssub.s32 %s17, 2
      %s24 = sadd.s32 %s17, 1
      %s25 = ssub.s32 %s17, %s24
      %p26 = scmp.eq.s32.totalorder %s25, 0
      %s28 = sadd.s32 %s27, 1
      %s29 = scalar_select %p26, %s27, %s28
      %p32 = pneg %p26
      %p33 = scmp.eq.s32.totalorder %s17, 1
      %p34 = por %p32, %p33
      %p35 = scmp.ne.s32.totalorder %s27, %s30
      %p36 = scmp.eq.s32.totalorder %s17, 0
      %p37 = por %p35, %p36
      %p38 = scmp.ne.s32.totalorder %s27, %s30
      %p39 = scmp.eq.s32.totalorder %s22, 1
      %p40 = por %p38, %p39
      %p41 = scmp.ne.s32.totalorder %s30, %s31
      %p42 = scmp.eq.s32.totalorder %s22, 0
      %p43 = por %p41, %p42
      %p44 = scmp.ne.s32.totalorder %s30, %s31
      %p45 = scmp.eq.s32.totalorder %s23, 1
      %p46 = por %p44, %p45
      %p48 = scmp.ne.s32.totalorder %s31, %s47
      %p49 = scmp.eq.s32.totalorder %s23, 0
      %p50 = por %p48, %p49
      %s52 = sadd.s32 %s51, 1
      %p55 = scmp.eq.s32.totalorder %s17, 1
      %p56 = scmp.ne.s32.totalorder %s51, %s53
      %p57 = scmp.eq.s32.totalorder %s17, 0
      %p58 = por %p56, %p57
      %p59 = scmp.ne.s32.totalorder %s51, %s53
      %p60 = scmp.eq.s32.totalorder %s22, 1
      %p61 = por %p59, %p60
      %p62 = scmp.ne.s32.totalorder %s53, %s54
      %p63 = scmp.eq.s32.totalorder %s22, 0
      %p64 = por %p62, %p63
      %p65 = scmp.ne.s32.totalorder %s53, %s54
      %p66 = scmp.eq.s32.totalorder %s23, 1
      %p67 = por %p65, %p66
      %p69 = scmp.ne.s32.totalorder %s54, %s68
      %p70 = scmp.eq.s32.totalorder %s23, 0
      %p71 = por %p69, %p70
      %s73 = sadd.s32 %s72, 1
      %p76 = scmp.eq.s32.totalorder %s17, 1
      %p77 = scmp.ne.s32.totalorder %s72, %s74
      %p78 = scmp.eq.s32.totalorder %s17, 0
      %p79 = por %p77, %p78
      %p80 = scmp.ne.s32.totalorder %s72, %s74
      %p81 = scmp.eq.s32.totalorder %s22, 1
      %p82 = por %p80, %p81
      %p83 = scmp.ne.s32.totalorder %s74, %s75
      %p84 = scmp.eq.s32.totalorder %s22, 0
      %p85 = por %p83, %p84
      %p86 = scmp.ne.s32.totalorder %s74, %s75
      %p87 = scmp.eq.s32.totalorder %s23, 1
      %p88 = por %p86, %p87
      %p90 = scmp.ne.s32.totalorder %s75, %s89
      %p91 = scmp.eq.s32.totalorder %s23, 0
      %p92 = por %p90, %p91
      %s94 = sadd.s32 %s93, 1
      %p97 = scmp.eq.s32.totalorder %s17, 1
      %p98 = scmp.ne.s32.totalorder %s93, %s95
      %p99 = scmp.eq.s32.totalorder %s17, 0
      %p100 = por %p98, %p99
      %p101 = scmp.ne.s32.totalorder %s93, %s95
      %p102 = scmp.eq.s32.totalorder %s22, 1
      %p103 = por %p101, %p102
      %p104 = scmp.ne.s32.totalorder %s95, %s96
      %p105 = scmp.eq.s32.totalorder %s22, 0
      %p106 = por %p104, %p105
      %p107 = scmp.ne.s32.totalorder %s95, %s96
      %p108 = scmp.eq.s32.totalorder %s23, 1
      %p109 = por %p107, %p108
      %p111 = scmp.ne.s32.totalorder %s96, %s110
      %p112 = scmp.eq.s32.totalorder %s23, 0
      %p113 = por %p111, %p112
      %s114 = ssub.s32 %s17, %s24
      %p115 = scmp.eq.s32.totalorder %s114, 0
      %s117 = sadd.s32 %s116, 1
      %s118 = scalar_select %p115, %s116, %s117
      %p121 = pneg %p115
      %p122 = scmp.eq.s32.totalorder %s17, 1
      %p123 = por %p121, %p122
      %p124 = scmp.ne.s32.totalorder %s116, %s119
      %p125 = scmp.eq.s32.totalorder %s17, 0
      %p126 = por %p124, %p125
      %p127 = scmp.ne.s32.totalorder %s116, %s119
      %p128 = scmp.eq.s32.totalorder %s22, 1
      %p129 = por %p127, %p128
      %p130 = scmp.ne.s32.totalorder %s119, %s120
      %p131 = scmp.eq.s32.totalorder %s22, 0
      %p132 = por %p130, %p131
      %p133 = scmp.ne.s32.totalorder %s119, %s120
      %p134 = scmp.eq.s32.totalorder %s23, 1
      %p135 = por %p133, %p134
      %p137 = scmp.ne.s32.totalorder %s120, %s136
      %p138 = scmp.eq.s32.totalorder %s23, 0
      %p139 = por %p137, %p138
      %p140 = scmp.le.s32.totalorder 1, %s17
      %p141 = scmp.lt.s32.totalorder %s17, 3
      %p142 = pnand %p140, %p141
      %p143 = pneg %p142
      // Predicated region
      $region9: #{tpu_custom_call.1} parent=5 // pred_check
        _
      $region10: #{tpu_custom_call.1} parent=5 // pred_check_branch
        %145 = sbr.rel (%p142) target = $region12
      $region11: #{tpu_custom_call.1} parent=5 // pred_region
        %s146 = ssub.s32 %s17, 1
        // Predicated region
        $region13: #{tpu_custom_call.1} parent=11 // pred_check
          %p147 = pneg %p64
        $region14: #{tpu_custom_call.1} parent=11 // pred_check_branch
          %149 = sbr.rel (%p147) target = $region16
        $region15: #{tpu_custom_call.1} parent=11 // pred_region
          _
        $region16: #{tpu_custom_call.1} parent=11 // pred_fallthru
          _
        // Predicated region
        $region17: #{tpu_custom_call.1} parent=11 // pred_check
          %p150 = pneg %p85
        $region18: #{tpu_custom_call.1} parent=11 // pred_check_branch
          %152 = sbr.rel (%p150) target = $region20
        $region19: #{tpu_custom_call.1} parent=11 // pred_region
          _
        $region20: #{tpu_custom_call.1} parent=11 // pred_fallthru
          _
        // Predicated region
        $region21: #{tpu_custom_call.1} parent=11 // pred_check
          %p153 = pneg %p106
        $region22: #{tpu_custom_call.1} parent=11 // pred_check_branch
          %155 = sbr.rel (%p153) target = $region24
        $region23: #{tpu_custom_call.1} parent=11 // pred_region
          _
        $region24: #{tpu_custom_call.1} parent=11 // pred_fallthru
          _
      $region12: #{tpu_custom_call.1} parent=5 // pred_fallthru
        _
      %p156 = scmp.lt.s32.totalorder %s17, 2
      // Predicated region
      $region25: #{tpu_custom_call.1} parent=5 // pred_check
        %p157 = pneg %p156
      $region26: #{tpu_custom_call.1} parent=5 // pred_check_branch
        %159 = sbr.rel (%p157) target = $region28
      $region27: #{tpu_custom_call.1} parent=5 // pred_region
        // Predicated region
        $region29: #{tpu_custom_call.1} parent=27 // pred_check
          %p160 = pneg %p37
        $region30: #{tpu_custom_call.1} parent=27 // pred_check_branch
          %162 = sbr.rel (%p160) target = $region32
        $region31: #{tpu_custom_call.1} parent=27 // pred_region
          %s163 = sand.u32 %s27, 1
          %s164 = scalar_lea.sflag [#allocation4], %s163
          %s165 = sand.u32 %s27, 1
          %s166 = smul.addr %s165, 128
          %s167 = scalar_lea.vmem [#allocation3], %s166
          %s168 = smul.u32 16, %s17
          %170 = vsyncadd %s164, 0
          %s171 = smul.addr %s168, 8
          %s172 = scalar_lea.hbm %s0, %s171
          %s173 = sshll.u32 %s172, 4
          %s174 = int_to_ptr.hbm [resolvable:$true] %s173
          %s175 = sshll.u32 %s167, 4
          %s176 = int_to_ptr.vmem [resolvable:$true] %s175
          %181 = dma.hbm_to_vmem [thread:$0]  %s174, 2048, %s176, %s164, 128, 128, 8
        $region32: #{tpu_custom_call.1} parent=27 // pred_fallthru
          _
      $region28: #{tpu_custom_call.1} parent=5 // pred_fallthru
        _
      %p182 = scmp.le.s32.totalorder 1, %s17
      %p183 = scmp.lt.s32.totalorder %s17, 3
      %p184 = pnand %p182, %p183
      %p185 = pneg %p184
      // Predicated region
      $region33: #{tpu_custom_call.1} parent=5 // pred_check
        _
      $region34: #{tpu_custom_call.1} parent=5 // pred_check_branch
        %187 = sbr.rel (%p184) target = $region36
      $region35: #{tpu_custom_call.1} parent=5 // pred_region
        %s188 = ssub.s32 %s17, 1
        %s189 = sand.u32 %s30, 1
        %s190 = scalar_lea.sflag [#allocation4], %s189
        %s191 = sand.u32 %s30, 1
        %s192 = smul.addr %s191, 128
        %s193 = scalar_lea.vmem [#allocation3], %s192
        // Predicated region
        $region37: #{tpu_custom_call.1} parent=35 // pred_check
          %p194 = pneg %p43
        $region38: #{tpu_custom_call.1} parent=35 // pred_check_branch
          %196 = sbr.rel (%p194) target = $region40
        $region39: #{tpu_custom_call.1} parent=35 // pred_region
          %198 = dma.done %s190, 2048
        $region40: #{tpu_custom_call.1} parent=35 // pred_fallthru
          _
        %s199 = sand.u32 %s30, 1
        %s200 = scalar_lea.sflag [#allocation4], %s199
        %s201 = sand.u32 %s30, 1
        %s202 = smul.addr %s201, 128
        %s203 = scalar_lea.vmem [#allocation3], %s202
        %p204 = pneg %p43
        %p205 = pneg %p40
        %p206 = pneg %p64
        %p207 = pneg %p61
        %p208 = pneg %p85
        %p209 = pneg %p82
        %p210 = pneg %p106
        %p211 = pneg %p103
        %p212 = pneg %p132
        %p213 = pneg %p129
        %s214 = sand.u32 %s119, 1
        %s215 = scalar_lea.sflag [#allocation5], %s214
        %s216 = sand.u32 %s119, 1
        %s217 = scalar_lea.vmem [#allocation6], %s216
        %s218 = smul.u32 16, %s22
        %v220 = vld [vmem:[%s193] sm:$0xff]
        %v221 = vld [vmem:[%s193 + $0x8] sm:$0xff]
        %v222 = vld [vmem:[%s193 + $0x10] sm:$0xff]
        %v223 = vld [vmem:[%s193 + $0x18] sm:$0xff]
        %v224 = vld [vmem:[%s193 + $0x20] sm:$0xff]
        %v225 = vld [vmem:[%s193 + $0x28] sm:$0xff]
        %v226 = vld [vmem:[%s193 + $0x30] sm:$0xff]
        %v227 = vld [vmem:[%s193 + $0x38] sm:$0xff]
        %v228 = vld [vmem:[%s193 + $0x40] sm:$0xff]
        %v229 = vld [vmem:[%s193 + $0x48] sm:$0xff]
        %v230 = vld [vmem:[%s193 + $0x50] sm:$0xff]
        %v231 = vld [vmem:[%s193 + $0x58] sm:$0xff]
        %v232 = vld [vmem:[%s193 + $0x60] sm:$0xff]
        %v233 = vld [vmem:[%s193 + $0x68] sm:$0xff]
        %v234 = vld [vmem:[%s193 + $0x70] sm:$0xff]
        %v235 = vld [vmem:[%s193 + $0x78] sm:$0xff]
        %v236 = vpack.c.bf16 %v221, %v220
        %v237 = vpack.c.bf16 %v223, %v222
        %v238 = vpack.c.bf16 %v225, %v224
        %v239 = vpack.c.bf16 %v227, %v226
        %v240 = vpack.c.bf16 %v229, %v228
        %v241 = vpack.c.bf16 %v231, %v230
        %v242 = vpack.c.bf16 %v233, %v232
        %v243 = vpack.c.bf16 %v235, %v234
        %v244 = vld [vmem:[%s1] sm:$0xff]
        %v245 = vld [vmem:[%s1 + $0x8] sm:$0xff]
        %v246 = vld [vmem:[%s1 + $0x10] sm:$0xff]
        %v247 = vld [vmem:[%s1 + $0x18] sm:$0xff]
        %v248 = vld [vmem:[%s1 + $0x20] sm:$0xff]
        %v249 = vld [vmem:[%s1 + $0x28] sm:$0xff]
        %v250 = vld [vmem:[%s1 + $0x30] sm:$0xff]
        %v251 = vld [vmem:[%s1 + $0x38] sm:$0xff]
        %v252 = vld [vmem:[%s1 + $0x40] sm:$0xff]
        %v253 = vld [vmem:[%s1 + $0x48] sm:$0xff]
        %v254 = vld [vmem:[%s1 + $0x50] sm:$0xff]
        %v255 = vld [vmem:[%s1 + $0x58] sm:$0xff]
        %v256 = vld [vmem:[%s1 + $0x60] sm:$0xff]
        %v257 = vld [vmem:[%s1 + $0x68] sm:$0xff]
        %v258 = vld [vmem:[%s1 + $0x70] sm:$0xff]
        %v259 = vld [vmem:[%s1 + $0x78] sm:$0xff]
        %v260 = vpack.c.bf16 %v245, %v244
        %v261 = vpack.c.bf16 %v247, %v246
        %v262 = vpack.c.bf16 %v249, %v248
        %v263 = vpack.c.bf16 %v251, %v250
        %v264 = vpack.c.bf16 %v253, %v252
        %v265 = vpack.c.bf16 %v255, %v254
        %v266 = vpack.c.bf16 %v257, %v256
        %v267 = vpack.c.bf16 %v259, %v258
        %v268 = vld [vmem:[%s1 + $0x80] sm:$0x1]
        %v269 = vperm.slane %v268, 0
        %270 = vmatpush.bf16.msra.mxu0 %v267
        %271 = vmatpush.bf16.msra.mxu0 %v266
        %272 = vmatpush.bf16.msra.mxu0 %v265
        %273 = vmatpush.bf16.msra.mxu0 %v264
        %274 = vmatpush.bf16.msra.mxu0 %v263
        %275 = vmatpush.bf16.msra.mxu0 %v262
        %276 = vmatpush.bf16.msra.mxu0 %v261
        %277 = vmatpush.bf16.msra.mxu0 %v260
        %278 = vmatmul.bf16.gmra.mxu0 %v236
        %v279 = vpop.f32.mrf.mxu0
        %v280 = vadd.f32 %v269, %v279
        %v281 = vpop.f32.mrf.mxu0
        %v282 = vadd.f32 %v269, %v281
        %283 = vmatmul.bf16.gmra.mxu0 %v237
        %v284 = vpop.f32.mrf.mxu0
        %v285 = vadd.f32 %v269, %v284
        %v286 = vpop.f32.mrf.mxu0
        %v287 = vadd.f32 %v269, %v286
        %288 = vmatmul.bf16.gmra.mxu0 %v238
        %v289 = vpop.f32.mrf.mxu0
        %v290 = vadd.f32 %v269, %v289
        %v291 = vpop.f32.mrf.mxu0
        %v292 = vadd.f32 %v269, %v291
        %293 = vmatmul.bf16.gmra.mxu0 %v239
        %v294 = vpop.f32.mrf.mxu0
        %v295 = vadd.f32 %v269, %v294
        %v296 = vpop.f32.mrf.mxu0
        %v297 = vadd.f32 %v269, %v296
        %298 = vmatmul.bf16.gmra.mxu0 %v240
        %v299 = vpop.f32.mrf.mxu0
        %v300 = vadd.f32 %v269, %v299
        %v301 = vpop.f32.mrf.mxu0
        %v302 = vadd.f32 %v269, %v301
        %303 = vmatmul.bf16.gmra.mxu0 %v241
        %v304 = vpop.f32.mrf.mxu0
        %v305 = vadd.f32 %v269, %v304
        %v306 = vpop.f32.mrf.mxu0
        %v307 = vadd.f32 %v269, %v306
        %308 = vmatmul.bf16.gmra.mxu0 %v242
        %v309 = vpop.f32.mrf.mxu0
        %v310 = vadd.f32 %v269, %v309
        %v311 = vpop.f32.mrf.mxu0
        %v312 = vadd.f32 %v269, %v311
        %313 = vmatmul.bf16.gmra.mxu0 %v243
        %v314 = vpop.f32.mrf.mxu0
        %v315 = vadd.f32 %v269, %v314
        %v316 = vpop.f32.mrf.mxu0
        %v317 = vadd.f32 %v269, %v316
        %318 = vdwg.mxu0
        %v319 = vmax.f32 %v280, 0.0
        %v320 = vmax.f32 %v282, 0.0
        %v321 = vmax.f32 %v285, 0.0
        %v322 = vmax.f32 %v287, 0.0
        %v323 = vmax.f32 %v290, 0.0
        %v324 = vmax.f32 %v292, 0.0
        %v325 = vmax.f32 %v295, 0.0
        %v326 = vmax.f32 %v297, 0.0
        %v327 = vmax.f32 %v300, 0.0
        %v328 = vmax.f32 %v302, 0.0
        %v329 = vmax.f32 %v305, 0.0
        %v330 = vmax.f32 %v307, 0.0
        %v331 = vmax.f32 %v310, 0.0
        %v332 = vmax.f32 %v312, 0.0
        %v333 = vmax.f32 %v315, 0.0
        %v334 = vmax.f32 %v317, 0.0
        %v335 = vld [vmem:[%s2] sm:$0xff]
        %v336 = vld [vmem:[%s2 + $0x8] sm:$0xff]
        %v337 = vld [vmem:[%s2 + $0x10] sm:$0xff]
        %v338 = vld [vmem:[%s2 + $0x18] sm:$0xff]
        %v339 = vpack.c.bf16 %v337, %v335
        %v340 = vpack.c.bf16 %v338, %v336
        %s341 = scalar_lea.vmem %s2, 32
        %v342 = vld [vmem:[%s341] ss:$8 sm:$0x3]
        %v343 = vpack.c.bf16 %v320, %v319
        %v344 = vpack.c.bf16 %v322, %v321
        %v345 = vpack.c.bf16 %v324, %v323
        %v346 = vpack.c.bf16 %v326, %v325
        %v347 = vpack.c.bf16 %v328, %v327
        %v348 = vpack.c.bf16 %v330, %v329
        %v349 = vpack.c.bf16 %v332, %v331
        %v350 = vpack.c.bf16 %v334, %v333
        %v352 = vperm.slane %v342, 0
        %v353 = vperm.slane %v342, 1
        %vm356 = vcmask 130048
        %v358 = vsel %vm356, %v343, 0
        %v361 = vsel %vm356, %v344, 0
        %v364 = vsel %vm356, %v345, 0
        %v367 = vsel %vm356, %v346, 0
        %v370 = vsel %vm356, %v347, 0
        %v373 = vsel %vm356, %v348, 0
        %v376 = vsel %vm356, %v349, 0
        %v379 = vsel %vm356, %v350, 0
        %381 = vmatpush.bf16.msra.mxu0 0
        %382 = vmatpush.bf16.msra.mxu0 0
        %383 = vmatpush.bf16.msra.mxu0 0
        %384 = vmatpush.bf16.msra.mxu0 0
        %385 = vmatpush.bf16.msra.mxu0 0
        %386 = vmatpush.bf16.msra.mxu0 0
        %387 = vmatpush.bf16.msra.mxu0 0
        %388 = vmatpush.bf16.msra.mxu0 %v339
        %389 = vmatmul.bf16.gmra.mxu0 %v358
        %v390 = vpop.f32.mrf.mxu0
        %v391 = vadd.f32 %v352, %v390
        %v392 = vpop.f32.mrf.mxu0
        %v393 = vadd.f32 %v352, %v392
        %394 = vmatmul.bf16.gmra.mxu0 %v361
        %v395 = vpop.f32.mrf.mxu0
        %v396 = vadd.f32 %v352, %v395
        %v397 = vpop.f32.mrf.mxu0
        %v398 = vadd.f32 %v352, %v397
        %399 = vmatmul.bf16.gmra.mxu0 %v364
        %v400 = vpop.f32.mrf.mxu0
        %v401 = vadd.f32 %v352, %v400
        %v402 = vpop.f32.mrf.mxu0
        %v403 = vadd.f32 %v352, %v402
        %404 = vmatmul.bf16.gmra.mxu0 %v367
        %v405 = vpop.f32.mrf.mxu0
        %v406 = vadd.f32 %v352, %v405
        %v407 = vpop.f32.mrf.mxu0
        %v408 = vadd.f32 %v352, %v407
        %409 = vmatmul.bf16.gmra.mxu0 %v370
        %v410 = vpop.f32.mrf.mxu0
        %v411 = vadd.f32 %v352, %v410
        %v412 = vpop.f32.mrf.mxu0
        %v413 = vadd.f32 %v352, %v412
        %414 = vmatmul.bf16.gmra.mxu0 %v373
        %v415 = vpop.f32.mrf.mxu0
        %v416 = vadd.f32 %v352, %v415
        %v417 = vpop.f32.mrf.mxu0
        %v418 = vadd.f32 %v352, %v417
        %419 = vmatmul.bf16.gmra.mxu0 %v376
        %v420 = vpop.f32.mrf.mxu0
        %v421 = vadd.f32 %v352, %v420
        %v422 = vpop.f32.mrf.mxu0
        %v423 = vadd.f32 %v352, %v422
        %424 = vmatmul.bf16.gmra.mxu0 %v379
        %v425 = vpop.f32.mrf.mxu0
        %v426 = vadd.f32 %v352, %v425
        %v427 = vpop.f32.mrf.mxu0
        %v428 = vadd.f32 %v352, %v427
        %429 = vdwg.mxu0
        %430 = vmatpush.bf16.msra.mxu0 0
        %431 = vmatpush.bf16.msra.mxu0 0
        %432 = vmatpush.bf16.msra.mxu0 0
        %433 = vmatpush.bf16.msra.mxu0 0
        %434 = vmatpush.bf16.msra.mxu0 0
        %435 = vmatpush.bf16.msra.mxu0 0
        %436 = vmatpush.bf16.msra.mxu0 0
        %437 = vmatpush.bf16.msra.mxu0 %v340
        %438 = vmatmul.bf16.gmra.mxu0 %v358
        %v439 = vpop.f32.mrf.mxu0
        %v440 = vadd.f32 %v353, %v439
        %v441 = vpop.f32.mrf.mxu0
        %v442 = vadd.f32 %v353, %v441
        %443 = vmatmul.bf16.gmra.mxu0 %v361
        %v444 = vpop.f32.mrf.mxu0
        %v445 = vadd.f32 %v353, %v444
        %v446 = vpop.f32.mrf.mxu0
        %v447 = vadd.f32 %v353, %v446
        %448 = vmatmul.bf16.gmra.mxu0 %v364
        %v449 = vpop.f32.mrf.mxu0
        %v450 = vadd.f32 %v353, %v449
        %v451 = vpop.f32.mrf.mxu0
        %v452 = vadd.f32 %v353, %v451
        %453 = vmatmul.bf16.gmra.mxu0 %v367
        %v454 = vpop.f32.mrf.mxu0
        %v455 = vadd.f32 %v353, %v454
        %v456 = vpop.f32.mrf.mxu0
        %v457 = vadd.f32 %v353, %v456
        %458 = vmatmul.bf16.gmra.mxu0 %v370
        %v459 = vpop.f32.mrf.mxu0
        %v460 = vadd.f32 %v353, %v459
        %v461 = vpop.f32.mrf.mxu0
        %v462 = vadd.f32 %v353, %v461
        %463 = vmatmul.bf16.gmra.mxu0 %v373
        %v464 = vpop.f32.mrf.mxu0
        %v465 = vadd.f32 %v353, %v464
        %v466 = vpop.f32.mrf.mxu0
        %v467 = vadd.f32 %v353, %v466
        %468 = vmatmul.bf16.gmra.mxu0 %v376
        %v469 = vpop.f32.mrf.mxu0
        %v470 = vadd.f32 %v353, %v469
        %v471 = vpop.f32.mrf.mxu0
        %v472 = vadd.f32 %v353, %v471
        %473 = vmatmul.bf16.gmra.mxu0 %v379
        %v474 = vpop.f32.mrf.mxu0
        %v475 = vadd.f32 %v353, %v474
        %v476 = vpop.f32.mrf.mxu0
        %v477 = vadd.f32 %v353, %v476
        %478 = vdwg.mxu0
        %v479 = vmax.f32 %v391, 0.0
        %v480 = vmax.f32 %v440, 0.0
        %v481 = vmax.f32 %v393, 0.0
        %v482 = vmax.f32 %v442, 0.0
        %v483 = vmax.f32 %v396, 0.0
        %v484 = vmax.f32 %v445, 0.0
        %v485 = vmax.f32 %v398, 0.0
        %v486 = vmax.f32 %v447, 0.0
        %v487 = vmax.f32 %v401, 0.0
        %v488 = vmax.f32 %v450, 0.0
        %v489 = vmax.f32 %v403, 0.0
        %v490 = vmax.f32 %v452, 0.0
        %v491 = vmax.f32 %v406, 0.0
        %v492 = vmax.f32 %v455, 0.0
        %v493 = vmax.f32 %v408, 0.0
        %v494 = vmax.f32 %v457, 0.0
        %v495 = vmax.f32 %v411, 0.0
        %v496 = vmax.f32 %v460, 0.0
        %v497 = vmax.f32 %v413, 0.0
        %v498 = vmax.f32 %v462, 0.0
        %v499 = vmax.f32 %v416, 0.0
        %v500 = vmax.f32 %v465, 0.0
        %v501 = vmax.f32 %v418, 0.0
        %v502 = vmax.f32 %v467, 0.0
        %v503 = vmax.f32 %v421, 0.0
        %v504 = vmax.f32 %v470, 0.0
        %v505 = vmax.f32 %v423, 0.0
        %v506 = vmax.f32 %v472, 0.0
        %v507 = vmax.f32 %v426, 0.0
        %v508 = vmax.f32 %v475, 0.0
        %v509 = vmax.f32 %v428, 0.0
        %v510 = vmax.f32 %v477, 0.0
        %s511 = scalar_lea.vmem %s2, 48
        %v512 = vld [vmem:[%s511] ss:$8 sm:$0x3]
        %v514 = vperm.slane %v512, 0
        %v515 = vperm.slane %v512, 1
        %v518 = vpack.c.bf16 %v514, %v514
        %v519 = vpack.c.bf16 %v515, %v515
        %v520 = vpack.c.bf16 %v481, %v479
        %v521 = vpack.c.bf16 %v482, %v480
        %v522 = vpack.c.bf16 %v485, %v483
        %v523 = vpack.c.bf16 %v486, %v484
        %v524 = vpack.c.bf16 %v489, %v487
        %v525 = vpack.c.bf16 %v490, %v488
        %v526 = vpack.c.bf16 %v493, %v491
        %v527 = vpack.c.bf16 %v494, %v492
        %v528 = vpack.c.bf16 %v497, %v495
        %v529 = vpack.c.bf16 %v498, %v496
        %v530 = vpack.c.bf16 %v501, %v499
        %v531 = vpack.c.bf16 %v502, %v500
        %v532 = vpack.c.bf16 %v505, %v503
        %v533 = vpack.c.bf16 %v506, %v504
        %v534 = vpack.c.bf16 %v509, %v507
        %v535 = vpack.c.bf16 %v510, %v508
        %s536 = sld [smem:[#allocation2]]
        %v537 = vstv %s536
        %538 = vmatpush.bf16.xpose.msra.mxu0 %v534
        %539 = vmatpush.bf16.xpose.msra.mxu0 %v532
        %540 = vmatpush.bf16.xpose.msra.mxu0 %v530
        %541 = vmatpush.bf16.xpose.msra.mxu0 %v528
        %542 = vmatpush.bf16.xpose.msra.mxu0 %v526
        %543 = vmatpush.bf16.xpose.msra.mxu0 %v524
        %544 = vmatpush.bf16.xpose.msra.mxu0 %v522
        %545 = vmatpush.bf16.xpose.msra.mxu0 %v520
        %546 = vmatmul.bf16.gmra.mxu0 %v518
        %v547 = vpop.f32.mrf.mxu0
        %v548 = vadd.f32 %v537, %v547
        %v549 = vpop.f32.mrf.mxu0
        %550 = vdwg.mxu0
        %551 = vmatpush.bf16.xpose.msra.mxu0 %v535
        %552 = vmatpush.bf16.xpose.msra.mxu0 %v533
        %553 = vmatpush.bf16.xpose.msra.mxu0 %v531
        %554 = vmatpush.bf16.xpose.msra.mxu0 %v529
        %555 = vmatpush.bf16.xpose.msra.mxu0 %v527
        %556 = vmatpush.bf16.xpose.msra.mxu0 %v525
        %557 = vmatpush.bf16.xpose.msra.mxu0 %v523
        %558 = vmatpush.bf16.xpose.msra.mxu0 %v521
        %559 = vmatmul.bf16.gmra.mxu0 %v519
        %v560 = vpop.f32.mrf.mxu0
        %v561 = vadd.f32 %v548, %v560
        %v562 = vpop.f32.mrf.mxu0
        %563 = vdwg.mxu0
        %v564 = vxor.u32 %v561, 2147483648
        %v565 = vmul.f32 %v564, 1.442695
        %v566 = vpow.pop %v565
        %v567 = vadd.f32 %v566, 1.0
        %v568 = vrcp.pop %v567
        %v569 = vmul.f32 %v567, %v568
        %v570 = vsub.f32 1.0, %v569
        %v571 = vmul.f32 %v568, %v570
        %v572 = vadd.f32 %v568, %v571
        %vm573 = vweird.f32 %v567
        %vm574 = vweird.f32 %v568
        %vm575 = vmor %vm573, %vm574
        %v576 = vsel %vm575, %v568, %v572
        %v577 = vand.u32 2147483647, %v567
        %vm578 = vcmp.eq.f32.partialorder %v577, 8.507059e+37
        %v579 = vand.u32 %v567, 2147483648
        %v580 = vor.u32 1.1754944e-38, %v579
        %v581 = vsel %vm578, %v580, %v576
        %v582 = vmul.f32 1.0, %v581
        %583 = vst [vmem:[%s217] sm:$0x1] %v582
        %s584 = sand.u32 %s119, 1
        %s585 = scalar_lea.sflag [#allocation5], %s584
        %s586 = sand.u32 %s119, 1
        %s587 = scalar_lea.vmem [#allocation6], %s586
        // Predicated region
        $region41: #{tpu_custom_call.1} parent=35 // pred_check
          %p588 = pneg %p129
        $region42: #{tpu_custom_call.1} parent=35 // pred_check_branch
          %590 = sbr.rel (%p588) target = $region44
        $region43: #{tpu_custom_call.1} parent=35 // pred_region
          %592 = vsyncadd %s585, 0
          %s593 = scalar_lea.hbm %s4, %s22
          %s595 = sshll.u32 %s587, 4
          %s596 = int_to_ptr.vmem [resolvable:$true] %s595
          %s597 = sshll.u32 %s593, 4
          %s598 = int_to_ptr.hbm [resolvable:$true] %s597
          %600 = dma.vmem_to_hbm [thread:$0]  %s596, 16, %s598, %s585
        $region44: #{tpu_custom_call.1} parent=35 // pred_fallthru
          _
      $region36: #{tpu_custom_call.1} parent=5 // pred_fallthru
        _
      %p601 = scmp.le.s32.totalorder 2, %s17
      // Predicated region
      $region45: #{tpu_custom_call.1} parent=5 // pred_check
        %p602 = pneg %p601
      $region46: #{tpu_custom_call.1} parent=5 // pred_check_branch
        %604 = sbr.rel (%p602) target = $region48
      $region47: #{tpu_custom_call.1} parent=5 // pred_region
        %s605 = ssub.s32 %s17, 2
        // Predicated region
        $region49: #{tpu_custom_call.1} parent=47 // pred_check
          %p606 = pneg %p135
        $region50: #{tpu_custom_call.1} parent=47 // pred_check_branch
          %608 = sbr.rel (%p606) target = $region52
        $region51: #{tpu_custom_call.1} parent=47 // pred_region
          %s609 = sand.u32 %s120, 1
          %s610 = scalar_lea.sflag [#allocation5], %s609
          %s611 = sand.u32 %s120, 1
          %s612 = scalar_lea.vmem [#allocation6], %s611
          %614 = dma.done %s610, 16
        $region52: #{tpu_custom_call.1} parent=47 // pred_fallthru
          _
      $region48: #{tpu_custom_call.1} parent=5 // pred_fallthru
        _
    $region6: #{tpu_custom_call.1} parent=1 // loop_footer
      %s21 = sadd.s32 1, %s17
    $region7: #{tpu_custom_call.1} parent=1 // loop_footer_branch
      %16 = sbr.rel target = $region3
    $region8: #{tpu_custom_call.1} parent=1 // loop_exit
      _
    %615 = vsyncpa [#allocation4], 1
    %s616 = scalar_lea.sflag [#allocation4], 1
    %617 = vsyncpa %s616, 1
    %618 = vsyncpa [#allocation5], 1
    %s619 = scalar_lea.sflag [#allocation5], 1
    %620 = vsyncpa %s619, 1

</llo_original>
